<compile_context>
chip_gen: v7x
topology: tpu7x:2x2x1
jax: 0.10.0
libtpu: 0.0.40
codegen_flags: <defaults>
</compile_context>

<pallas_src>
import math
import functools

import jax
import jax.numpy as jnp
from jax.experimental import pallas as pl
from jax.experimental.pallas import tpu as pltpu

_MASK_VALUE = -1e30  # finite "-inf": avoids NaN rows that mask.log() can give


def _cope_attn_kernel(q_ref, k_ref, kc_ref, v_ref, pe_ref, o_ref, *, npos):
    tq = q_ref.shape[1]
    L = k_ref.shape[1]
    H = q_ref.shape[2]
    scale = 1.0 / math.sqrt(H)

    # Fold the 1/sqrt(H) scale into q once; it distributes linearly through
    # the gate logits, the key logits and the positional logits.
    q = q_ref[0] * scale          # native dtype -> bf16 inputs stay bf16 on MXU
    k = k_ref[0]
    kc = kc_ref[0]
    v = v_ref[0]
    pe = pe_ref[...]              # (H, npos_pad), zero-padded

    def dot_t(a, b):  # a @ b^T on the MXU, f32 accumulation, no transpose copy
        return jax.lax.dot_general(a, b, (((1,), (1,)), ((), ())),
                                   preferred_element_type=jnp.float32)

    # --- causal mask synthesized in-kernel (no (B, L, L) mask from HBM) -----
    row = pl.program_id(1) * tq + jax.lax.broadcasted_iota(jnp.int32, (tq, L), 0)
    col = jax.lax.broadcasted_iota(jnp.int32, (tq, L), 1)
    causal = col <= row

    # --- CoPE gates: sigmoid(q @ key_cope^T / sqrt(H)) * mask ---------------
    gates = jnp.where(causal, jax.nn.sigmoid(dot_t(q, kc)), 0.0)   # (tq, L) f32

    # --- reverse cumsum along keys: log2(L) shift+add suffix scan -----------
    # positions[i, j] = sum_{m >= j} gates[i, m]   (kept in f32)
    positions = gates
    shift = 1
    while shift < L:
        shifted = jnp.concatenate(
            [positions[:, shift:], jnp.zeros((tq, shift), jnp.float32)], axis=1)
        positions = positions + shifted
        shift *= 2
    # NOTE: no explicit clamp(max=npos-1) needed — the telescoping
    # interpolation below saturates at plf[:, npos-1] automatically.

    # --- interpolated positional logits --------------------------------------
    # pos_logits[i, j] = plf[i, 0] + sum_p (plf[i, p+1] - plf[i, p])
    #                                      * clamp(positions[i, j] - p, 0, 1)
    # == the floor/ceil gather + linear interpolation of the reference.
    plf = jnp.dot(q, pe, preferred_element_type=jnp.float32)   # (tq, npos_pad)
    dplf = plf[:, 1:npos] - plf[:, 0:npos - 1]                 # (tq, npos-1)
    pos_logits = jnp.zeros((tq, L), jnp.float32)
    for p in range(npos - 1):                                  # npos is static
        w = jnp.minimum(jnp.maximum(positions - float(p), 0.0), 1.0)
        pos_logits = pos_logits + dplf[:, p:p + 1] * w
    pos_logits = pos_logits + plf[:, 0:1]

    # --- attention logits (cope_sep_key=True, cope_nodiv=False) -------------
    # scale already folded into q; where(-1e30) replaces attn_mask.log().
    attn_logits = jnp.where(causal, dot_t(q, k) + pos_logits, _MASK_VALUE)

    # --- softmax with EUP reciprocal -----------------------------------------
    m = jnp.max(attn_logits, axis=-1, keepdims=True)
    e = jnp.exp(attn_logits - m)
    denom = jnp.sum(e, axis=-1, keepdims=True)
    attn = e * pl.reciprocal(denom, approx=True)
    # TODO(synk): attention dropout omitted (drop=0.0 / eval mode => identity).

    out = jnp.dot(attn.astype(v.dtype), v, preferred_element_type=jnp.float32)
    o_ref[0] = out.astype(o_ref.dtype)


def cope_self_attn(query, key, key_cope, val, pos_emb, *, block_q=256):
    """CoPE self-attention forward with a causal mask (built in-kernel).

    TODO(synk): arbitrary (non-causal) attn_mask support would stream the mask
    as int8/bool blocks and expand it in-kernel instead of synthesizing iota.
    """
    B, L, H = query.shape
    assert key.shape == (B, L, H) and key_cope.shape == (B, L, H)
    assert val.shape == (B, L, H)
    assert pos_emb.shape[0] == H
    npos = pos_emb.shape[-1]

    # query-row tile that divides L (whole-L fallback for small sequences)
    if L % block_q == 0:
        tq = block_q
    elif L % 128 == 0:
        tq = 128
    else:
        tq = L
    nq = L // tq

    # zero-pad the npos axis to a lane-aligned width (multiple of 128)
    npos_pad = max(128, ((npos + 127) // 128) * 128)
    pe = jnp.pad(pos_emb, ((0, 0), (0, npos_pad - npos)))

    kernel = functools.partial(_cope_attn_kernel, npos=npos)

    # rough VMEM budget: double-buffered inputs/outputs + f32 (tq, L) temps
    itm = jnp.dtype(query.dtype).itemsize
    vmem_est = (2 * itm * (2 * tq * H + 3 * L * H)
                + 2 * 4 * H * npos_pad
                + 4 * (10 * tq * L + 4 * tq * npos_pad))
    vmem_limit = int(min(64 * 1024 * 1024, max(32 * 1024 * 1024, 2 * vmem_est)))

    q_spec = pl.BlockSpec((1, tq, H), lambda b, i: (b, i, 0))
    kv_spec = pl.BlockSpec((1, L, H), lambda b, i: (b, 0, 0))
    pe_spec = pl.BlockSpec((H, npos_pad), lambda b, i: (0, 0))

    return pl.pallas_call(
        kernel,
        out_shape=jax.ShapeDtypeStruct((B, L, H), query.dtype),
        grid=(B, nq),
        in_specs=[q_spec, kv_spec, kv_spec, kv_spec, pe_spec],
        out_specs=pl.BlockSpec((1, tq, H), lambda b, i: (b, i, 0)),
        compiler_params=pltpu.CompilerParams(
            dimension_semantics=("parallel", "parallel"),
            vmem_limit_bytes=vmem_limit),
    )(query, key, key_cope, val, pe)


def cope_self_attn_ref(query, key, key_cope, val, attn_mask, pos_emb):
    """Pure-JAX reference matching the PyTorch forward (for verification)."""
    H = query.shape[-1]
    npos = pos_emb.shape[-1]
    gate_logits = jnp.einsum('blh,bmh->blm', query, key_cope)
    gates = jax.nn.sigmoid(gate_logits / math.sqrt(H)) * attn_mask
    positions = jnp.flip(jnp.cumsum(jnp.flip(gates, -1), -1), -1)
    positions = jnp.minimum(positions, float(npos - 1))
    plf = jnp.einsum('blh,hp->blp', query, pos_emb)
    pc = jnp.ceil(positions).astype(jnp.int32)
    pf = jnp.floor(positions).astype(jnp.int32)
    lc = jnp.take_along_axis(plf, pc, axis=-1)
    lf = jnp.take_along_axis(plf, pf, axis=-1)
    w = positions - pf.astype(jnp.float32)
    pos_logits = lc * w + lf * (1.0 - w)
    attn_logits = jnp.einsum('blh,bmh->blm', query, key)
    attn_logits = (attn_logits + pos_logits) / math.sqrt(H)
    attn_logits = attn_logits + jnp.log(attn_mask)
    attn = jax.nn.softmax(attn_logits, axis=-1)
    return jnp.einsum('blm,bmh->blh', attn, val)


if __name__ == "__main__":
    B, L, H = 2, 8, 32          # batch, seq (block_size), head_dim
    npos = L + 1                # cope_npos=None -> block_size + 1

    k0 = jax.random.PRNGKey(0)
    kq, kk, kkc, kv, kp = jax.random.split(k0, 5)
    query = jax.random.normal(kq, (B, L, H), jnp.float32)
    key_ = jax.random.normal(kk, (B, L, H), jnp.float32)
    key_cope = jax.random.normal(kkc, (B, L, H), jnp.float32)
    val = jax.random.normal(kv, (B, L, H), jnp.float32)
    # The module inits pos_emb to zeros; use a deterministic non-zero init so
    # the positional-interpolation path is actually exercised.
    pos_emb = 0.02 * jax.random.normal(kp, (H, npos), jnp.float32)

    out = cope_self_attn(query, key_, key_cope, val, pos_emb)
    out = jax.block_until_ready(out)

    # causal {0,1} attention mask (reference only; kernel builds it in-kernel)
    attn_mask = jnp.broadcast_to(jnp.tril(jnp.ones((L, L), jnp.float32)),
                                 (B, L, L))
    ref = cope_self_attn_ref(query, key_, key_cope, val, attn_mask, pos_emb)
    max_err = float(jnp.max(jnp.abs(out - ref)))
    assert jnp.allclose(out, ref, atol=2e-3, rtol=2e-3), max_err
    print("KERNEL_OK")
</pallas_src>

<mosaic_0001>
module attributes {stable_mosaic.version = 11 : i64} {
  func.func @_cope_attn_kernel(%arg0: i32, %arg1: i32, %arg2: memref<1x8x32xf32, #tpu.memory_space<vmem>>, %arg3: memref<1x8x32xf32, #tpu.memory_space<vmem>>, %arg4: memref<1x8x32xf32, #tpu.memory_space<vmem>>, %arg5: memref<1x8x32xf32, #tpu.memory_space<vmem>>, %arg6: memref<32x128xf32, #tpu.memory_space<vmem>>, %arg7: memref<1x8x32xf32, #tpu.memory_space<vmem>>) attributes {dimension_semantics = [#tpu.dimension_semantics<parallel>, #tpu.dimension_semantics<parallel>], iteration_bounds = array<i64: 2, 1>, scalar_prefetch = 0 : i64, scratch_operands = 0 : i64, tpu.core_type = #tpu.core_type<tc>, window_params = [{transform_indices = @transform_0, window_bounds = array<i64: 1, 8, 32>}, {transform_indices = @transform_1, window_bounds = array<i64: 1, 8, 32>}, {transform_indices = @transform_2, window_bounds = array<i64: 1, 8, 32>}, {transform_indices = @transform_3, window_bounds = array<i64: 1, 8, 32>}, {pipeline_mode = #tpu.pipeline_mode<synchronous>, transform_indices = @transform_4, window_bounds = array<i64: 32, 128>}, {transform_indices = @transform_5, window_bounds = array<i64: 1, 8, 32>}]} {
    %c0 = arith.constant 0 : index
    %c0_0 = arith.constant 0 : index
    %c0_1 = arith.constant 0 : index
    %0 = vector.load %arg2[%c0, %c0_0, %c0_1] : memref<1x8x32xf32, #tpu.memory_space<vmem>>, vector<1x8x32xf32>
    %1 = vector.shape_cast %0 : vector<1x8x32xf32> to vector<8x32xf32>
    %cst = arith.constant 0.176776692 : f32
    %2 = vector.broadcast %cst : f32 to vector<8x32xf32>
    %3 = arith.mulf %1, %2 : vector<8x32xf32>
    %c0_2 = arith.constant 0 : index
    %c0_3 = arith.constant 0 : index
    %c0_4 = arith.constant 0 : index
    %4 = vector.load %arg3[%c0_2, %c0_3, %c0_4] : memref<1x8x32xf32, #tpu.memory_space<vmem>>, vector<1x8x32xf32>
    %5 = vector.shape_cast %4 : vector<1x8x32xf32> to vector<8x32xf32>
    %c0_5 = arith.constant 0 : index
    %c0_6 = arith.constant 0 : index
    %c0_7 = arith.constant 0 : index
    %6 = vector.load %arg4[%c0_5, %c0_6, %c0_7] : memref<1x8x32xf32, #tpu.memory_space<vmem>>, vector<1x8x32xf32>
    %7 = vector.shape_cast %6 : vector<1x8x32xf32> to vector<8x32xf32>
    %c0_8 = arith.constant 0 : index
    %c0_9 = arith.constant 0 : index
    %c0_10 = arith.constant 0 : index
    %8 = vector.load %arg5[%c0_8, %c0_9, %c0_10] : memref<1x8x32xf32, #tpu.memory_space<vmem>>, vector<1x8x32xf32>
    %9 = vector.shape_cast %8 : vector<1x8x32xf32> to vector<8x32xf32>
    %c0_11 = arith.constant 0 : index
    %c0_12 = arith.constant 0 : index
    %10 = vector.load %arg6[%c0_11, %c0_12] : memref<32x128xf32, #tpu.memory_space<vmem>>, vector<32x128xf32>
    %c8_i32 = arith.constant 8 : i32
    %11 = arith.muli %arg1, %c8_i32 : i32
    %12 = tpu.iota {dimensions = array<i32: 0>} : vector<8x8xi32>
    %13 = vector.broadcast %11 : i32 to vector<8x8xi32>
    %14 = arith.addi %13, %12 : vector<8x8xi32>
    %15 = tpu.iota {dimensions = array<i32: 1>} : vector<8x8xi32>
    %16 = arith.cmpi sle, %15, %14 : vector<8x8xi32>
    %cst_13 = arith.constant dense<0.000000e+00> : vector<8x8xf32>
    %17 = tpu.matmul %3, %7, %cst_13 {dimension_numbers = #tpu.dot_dimension_numbers<[1], [1], [0], [0], [0, 0, 1, 0], [], []>} : vector<8x32xf32>, vector<8x32xf32>, vector<8x8xf32> -> vector<8x8xf32>
    %18 = arith.negf %17 : vector<8x8xf32>
    %19 = math.exp %18 : vector<8x8xf32>
    %cst_14 = arith.constant 1.000000e+00 : f32
    %20 = vector.broadcast %cst_14 : f32 to vector<8x8xf32>
    %21 = arith.addf %20, %19 : vector<8x8xf32>
    %22 = arith.divf %20, %21 : vector<8x8xf32>
    %cst_15 = arith.constant 0.000000e+00 : f32
    %23 = vector.broadcast %cst_15 : f32 to vector<8x8xf32>
    %24 = arith.select %16, %22, %23 : vector<8x8xi1>, vector<8x8xf32>
    %25 = vector.extract_strided_slice %24 {offsets = [0, 1], sizes = [8, 7], strides = [1, 1]} : vector<8x8xf32> to vector<8x7xf32>
    %cst_16 = arith.constant 0.000000e+00 : f32
    %26 = vector.broadcast %cst_16 : f32 to vector<8x1xf32>
    %27 = tpu.concatenate %25, %26 in 1 : vector<8x7xf32>, vector<8x1xf32> -> vector<8x8xf32>
    %28 = arith.addf %24, %27 : vector<8x8xf32>
    %29 = vector.extract_strided_slice %28 {offsets = [0, 2], sizes = [8, 6], strides = [1, 1]} : vector<8x8xf32> to vector<8x6xf32>
    %cst_17 = arith.constant 0.000000e+00 : f32
    %30 = vector.broadcast %cst_17 : f32 to vector<8x2xf32>
    %31 = tpu.concatenate %29, %30 in 1 : vector<8x6xf32>, vector<8x2xf32> -> vector<8x8xf32>
    %32 = arith.addf %28, %31 : vector<8x8xf32>
    %33 = vector.extract_strided_slice %32 {offsets = [0, 4], sizes = [8, 4], strides = [1, 1]} : vector<8x8xf32> to vector<8x4xf32>
    %cst_18 = arith.constant 0.000000e+00 : f32
    %34 = vector.broadcast %cst_18 : f32 to vector<8x4xf32>
    %35 = tpu.concatenate %33, %34 in 1 : vector<8x4xf32>, vector<8x4xf32> -> vector<8x8xf32>
    %36 = arith.addf %32, %35 : vector<8x8xf32>
    %cst_19 = arith.constant dense<0.000000e+00> : vector<8x128xf32>
    %37 = tpu.matmul %3, %10, %cst_19 {dimension_numbers = #tpu.dot_dimension_numbers<[1], [0], [0], [1], [0, 0, 1, 1], [], []>} : vector<8x32xf32>, vector<32x128xf32>, vector<8x128xf32> -> vector<8x128xf32>
    %38 = vector.extract_strided_slice %37 {offsets = [0, 1], sizes = [8, 8], strides = [1, 1]} : vector<8x128xf32> to vector<8x8xf32>
    %39 = vector.extract_strided_slice %37 {offsets = [0, 0], sizes = [8, 8], strides = [1, 1]} : vector<8x128xf32> to vector<8x8xf32>
    %40 = arith.subf %38, %39 : vector<8x8xf32>
    %cst_20 = arith.constant 0.000000e+00 : f32
    %41 = vector.broadcast %cst_20 : f32 to vector<8x8xf32>
    %cst_21 = arith.constant 0.000000e+00 : f32
    %42 = vector.broadcast %cst_21 : f32 to vector<8x8xf32>
    %43 = arith.subf %36, %42 : vector<8x8xf32>
    %cst_22 = arith.constant 0.000000e+00 : f32
    %44 = vector.broadcast %cst_22 : f32 to vector<8x8xf32>
    %45 = arith.maximumf %43, %44 : vector<8x8xf32>
    %cst_23 = arith.constant 1.000000e+00 : f32
    %46 = vector.broadcast %cst_23 : f32 to vector<8x8xf32>
    %47 = arith.minimumf %45, %46 : vector<8x8xf32>
    %48 = vector.extract_strided_slice %40 {offsets = [0, 0], sizes = [8, 1], strides = [1, 1]} : vector<8x8xf32> to vector<8x1xf32>
    %49 = vector.broadcast %48 : vector<8x1xf32> to vector<8x8xf32>
    %50 = arith.mulf %49, %47 : vector<8x8xf32>
    %51 = arith.addf %41, %50 : vector<8x8xf32>
    %cst_24 = arith.constant 1.000000e+00 : f32
    %52 = vector.broadcast %cst_24 : f32 to vector<8x8xf32>
    %53 = arith.subf %36, %52 : vector<8x8xf32>
    %cst_25 = arith.constant 0.000000e+00 : f32
    %54 = vector.broadcast %cst_25 : f32 to vector<8x8xf32>
    %55 = arith.maximumf %53, %54 : vector<8x8xf32>
    %cst_26 = arith.constant 1.000000e+00 : f32
    %56 = vector.broadcast %cst_26 : f32 to vector<8x8xf32>
    %57 = arith.minimumf %55, %56 : vector<8x8xf32>
    %58 = vector.extract_strided_slice %40 {offsets = [0, 1], sizes = [8, 1], strides = [1, 1]} : vector<8x8xf32> to vector<8x1xf32>
    %59 = vector.broadcast %58 : vector<8x1xf32> to vector<8x8xf32>
    %60 = arith.mulf %59, %57 : vector<8x8xf32>
    %61 = arith.addf %51, %60 : vector<8x8xf32>
    %cst_27 = arith.constant 2.000000e+00 : f32
    %62 = vector.broadcast %cst_27 : f32 to vector<8x8xf32>
    %63 = arith.subf %36, %62 : vector<8x8xf32>
    %cst_28 = arith.constant 0.000000e+00 : f32
    %64 = vector.broadcast %cst_28 : f32 to vector<8x8xf32>
    %65 = arith.maximumf %63, %64 : vector<8x8xf32>
    %cst_29 = arith.constant 1.000000e+00 : f32
    %66 = vector.broadcast %cst_29 : f32 to vector<8x8xf32>
    %67 = arith.minimumf %65, %66 : vector<8x8xf32>
    %68 = vector.extract_strided_slice %40 {offsets = [0, 2], sizes = [8, 1], strides = [1, 1]} : vector<8x8xf32> to vector<8x1xf32>
    %69 = vector.broadcast %68 : vector<8x1xf32> to vector<8x8xf32>
    %70 = arith.mulf %69, %67 : vector<8x8xf32>
    %71 = arith.addf %61, %70 : vector<8x8xf32>
    %cst_30 = arith.constant 3.000000e+00 : f32
    %72 = vector.broadcast %cst_30 : f32 to vector<8x8xf32>
    %73 = arith.subf %36, %72 : vector<8x8xf32>
    %cst_31 = arith.constant 0.000000e+00 : f32
    %74 = vector.broadcast %cst_31 : f32 to vector<8x8xf32>
    %75 = arith.maximumf %73, %74 : vector<8x8xf32>
    %cst_32 = arith.constant 1.000000e+00 : f32
    %76 = vector.broadcast %cst_32 : f32 to vector<8x8xf32>
    %77 = arith.minimumf %75, %76 : vector<8x8xf32>
    %78 = vector.extract_strided_slice %40 {offsets = [0, 3], sizes = [8, 1], strides = [1, 1]} : vector<8x8xf32> to vector<8x1xf32>
    %79 = vector.broadcast %78 : vector<8x1xf32> to vector<8x8xf32>
    %80 = arith.mulf %79, %77 : vector<8x8xf32>
    %81 = arith.addf %71, %80 : vector<8x8xf32>
    %cst_33 = arith.constant 4.000000e+00 : f32
    %82 = vector.broadcast %cst_33 : f32 to vector<8x8xf32>
    %83 = arith.subf %36, %82 : vector<8x8xf32>
    %cst_34 = arith.constant 0.000000e+00 : f32
    %84 = vector.broadcast %cst_34 : f32 to vector<8x8xf32>
    %85 = arith.maximumf %83, %84 : vector<8x8xf32>
    %cst_35 = arith.constant 1.000000e+00 : f32
    %86 = vector.broadcast %cst_35 : f32 to vector<8x8xf32>
    %87 = arith.minimumf %85, %86 : vector<8x8xf32>
    %88 = vector.extract_strided_slice %40 {offsets = [0, 4], sizes = [8, 1], strides = [1, 1]} : vector<8x8xf32> to vector<8x1xf32>
    %89 = vector.broadcast %88 : vector<8x1xf32> to vector<8x8xf32>
    %90 = arith.mulf %89, %87 : vector<8x8xf32>
    %91 = arith.addf %81, %90 : vector<8x8xf32>
    %cst_36 = arith.constant 5.000000e+00 : f32
    %92 = vector.broadcast %cst_36 : f32 to vector<8x8xf32>
    %93 = arith.subf %36, %92 : vector<8x8xf32>
    %cst_37 = arith.constant 0.000000e+00 : f32
    %94 = vector.broadcast %cst_37 : f32 to vector<8x8xf32>
    %95 = arith.maximumf %93, %94 : vector<8x8xf32>
    %cst_38 = arith.constant 1.000000e+00 : f32
    %96 = vector.broadcast %cst_38 : f32 to vector<8x8xf32>
    %97 = arith.minimumf %95, %96 : vector<8x8xf32>
    %98 = vector.extract_strided_slice %40 {offsets = [0, 5], sizes = [8, 1], strides = [1, 1]} : vector<8x8xf32> to vector<8x1xf32>
    %99 = vector.broadcast %98 : vector<8x1xf32> to vector<8x8xf32>
    %100 = arith.mulf %99, %97 : vector<8x8xf32>
    %101 = arith.addf %91, %100 : vector<8x8xf32>
    %cst_39 = arith.constant 6.000000e+00 : f32
    %102 = vector.broadcast %cst_39 : f32 to vector<8x8xf32>
    %103 = arith.subf %36, %102 : vector<8x8xf32>
    %cst_40 = arith.constant 0.000000e+00 : f32
    %104 = vector.broadcast %cst_40 : f32 to vector<8x8xf32>
    %105 = arith.maximumf %103, %104 : vector<8x8xf32>
    %cst_41 = arith.constant 1.000000e+00 : f32
    %106 = vector.broadcast %cst_41 : f32 to vector<8x8xf32>
    %107 = arith.minimumf %105, %106 : vector<8x8xf32>
    %108 = vector.extract_strided_slice %40 {offsets = [0, 6], sizes = [8, 1], strides = [1, 1]} : vector<8x8xf32> to vector<8x1xf32>
    %109 = vector.broadcast %108 : vector<8x1xf32> to vector<8x8xf32>
    %110 = arith.mulf %109, %107 : vector<8x8xf32>
    %111 = arith.addf %101, %110 : vector<8x8xf32>
    %cst_42 = arith.constant 7.000000e+00 : f32
    %112 = vector.broadcast %cst_42 : f32 to vector<8x8xf32>
    %113 = arith.subf %36, %112 : vector<8x8xf32>
    %cst_43 = arith.constant 0.000000e+00 : f32
    %114 = vector.broadcast %cst_43 : f32 to vector<8x8xf32>
    %115 = arith.maximumf %113, %114 : vector<8x8xf32>
    %cst_44 = arith.constant 1.000000e+00 : f32
    %116 = vector.broadcast %cst_44 : f32 to vector<8x8xf32>
    %117 = arith.minimumf %115, %116 : vector<8x8xf32>
    %118 = vector.extract_strided_slice %40 {offsets = [0, 7], sizes = [8, 1], strides = [1, 1]} : vector<8x8xf32> to vector<8x1xf32>
    %119 = vector.broadcast %118 : vector<8x1xf32> to vector<8x8xf32>
    %120 = arith.mulf %119, %117 : vector<8x8xf32>
    %121 = arith.addf %111, %120 : vector<8x8xf32>
    %122 = vector.extract_strided_slice %37 {offsets = [0, 0], sizes = [8, 1], strides = [1, 1]} : vector<8x128xf32> to vector<8x1xf32>
    %123 = vector.broadcast %122 : vector<8x1xf32> to vector<8x8xf32>
    %124 = arith.addf %121, %123 : vector<8x8xf32>
    %cst_45 = arith.constant dense<0.000000e+00> : vector<8x8xf32>
    %125 = tpu.matmul %3, %5, %cst_45 {dimension_numbers = #tpu.dot_dimension_numbers<[1], [1], [0], [0], [0, 0, 1, 0], [], []>} : vector<8x32xf32>, vector<8x32xf32>, vector<8x8xf32> -> vector<8x8xf32>
    %126 = arith.addf %125, %124 : vector<8x8xf32>
    %cst_46 = arith.constant -1.000000e+30 : f32
    %127 = vector.broadcast %cst_46 : f32 to vector<8x8xf32>
    %128 = arith.select %16, %126, %127 : vector<8x8xi1>, vector<8x8xf32>
    %cst_47 = arith.constant dense<0xFF800000> : vector<8xf32>
    %129 = vector.multi_reduction <maximumf>, %128, %cst_47 [1] : vector<8x8xf32> to vector<8xf32>
    %130 = vector.shape_cast %129 : vector<8xf32> to vector<8x1xf32>
    %131 = vector.broadcast %130 : vector<8x1xf32> to vector<8x8xf32>
    %132 = arith.subf %128, %131 : vector<8x8xf32>
    %133 = math.exp %132 : vector<8x8xf32>
    %cst_48 = arith.constant dense<0.000000e+00> : vector<8xf32>
    %134 = vector.multi_reduction <add>, %133, %cst_48 [1] : vector<8x8xf32> to vector<8xf32>
    %135 = vector.shape_cast %134 : vector<8xf32> to vector<8x1xf32>
    %136 = tpu.reciprocal %135 {approx = true} : vector<8x1xf32> -> vector<8x1xf32>
    %137 = vector.broadcast %136 : vector<8x1xf32> to vector<8x8xf32>
    %138 = arith.mulf %133, %137 : vector<8x8xf32>
    %cst_49 = arith.constant dense<0.000000e+00> : vector<8x32xf32>
    %139 = tpu.matmul %138, %9, %cst_49 {dimension_numbers = #tpu.dot_dimension_numbers<[1], [0], [0], [1], [0, 0, 1, 1], [], []>} : vector<8x8xf32>, vector<8x32xf32>, vector<8x32xf32> -> vector<8x32xf32>
    %c0_50 = arith.constant 0 : index
    %c0_51 = arith.constant 0 : index
    %c0_52 = arith.constant 0 : index
    %140 = vector.load %arg7[%c0_50, %c0_51, %c0_52] : memref<1x8x32xf32, #tpu.memory_space<vmem>>, vector<1x8x32xf32>
    %141 = vector.shape_cast %140 : vector<1x8x32xf32> to vector<8x32xf32>
    %142 = vector.shape_cast %139 : vector<8x32xf32> to vector<1x8x32xf32>
    tpu.vector_store %arg7[%c0_50, %c0_51, %c0_52], %142 {strides = array<i32>} : memref<1x8x32xf32, #tpu.memory_space<vmem>>, vector<1x8x32xf32>,
    return
  }
  func.func @transform_0(%arg0: i32, %arg1: i32) -> (i32, i32, i32) {
    %c0_i32 = arith.constant 0 : i32
    %c0_i32_0 = arith.constant 0 : i32
    return %arg0, %arg1, %c0_i32 : i32, i32, i32
  }
  func.func @transform_1(%arg0: i32, %arg1: i32) -> (i32, i32, i32) {
    %c0_i32 = arith.constant 0 : i32
    %c0_i32_0 = arith.constant 0 : i32
    %c0_i32_1 = arith.constant 0 : i32
    return %arg0, %c0_i32, %c0_i32_0 : i32, i32, i32
  }
  func.func @transform_2(%arg0: i32, %arg1: i32) -> (i32, i32, i32) {
    %c0_i32 = arith.constant 0 : i32
    %c0_i32_0 = arith.constant 0 : i32
    %c0_i32_1 = arith.constant 0 : i32
    return %arg0, %c0_i32, %c0_i32_0 : i32, i32, i32
  }
  func.func @transform_3(%arg0: i32, %arg1: i32) -> (i32, i32, i32) {
    %c0_i32 = arith.constant 0 : i32
    %c0_i32_0 = arith.constant 0 : i32
    %c0_i32_1 = arith.constant 0 : i32
    return %arg0, %c0_i32, %c0_i32_0 : i32, i32, i32
  }
  func.func @transform_4(%arg0: i32, %arg1: i32) -> (i32, i32) {
    %c0_i32 = arith.constant 0 : i32
    %c0_i32_0 = arith.constant 0 : i32
    %c0_i32_1 = arith.constant 0 : i32
    return %c0_i32, %c0_i32_0 : i32, i32
  }
  func.func @transform_5(%arg0: i32, %arg1: i32) -> (i32, i32, i32) {
    %c0_i32 = arith.constant 0 : i32
    %c0_i32_0 = arith.constant 0 : i32
    return %arg0, %arg1, %c0_i32 : i32, i32, i32
  }
}

</mosaic_0001>

<llo_original>
// kernel: tpu_custom_call.1
$region0: #{tpu_custom_call.1}
  #allocation0 [shape = 'u32[]', space=smem, size = 0x4, offset = 0x4, fixed_abs, tag = 'smem constant byte address 0x4 - core index']
  #allocation1 [shape = 'u32[144,128]{1,0:T(1,128)}', space=vmem, size = 0x12000, scoped, tag = 'internal scratch']
  %s0 = inlined_call_operand.hbm [shape: f32[2,8,32], index: 0, kind: input, shape index: {}]
  %s1 = inlined_call_operand.hbm [shape: f32[2,8,32], index: 1, kind: input, shape index: {}]
  %s2 = inlined_call_operand.hbm [shape: f32[2,8,32], index: 2, kind: input, shape index: {}]
  %s3 = inlined_call_operand.hbm [shape: f32[2,8,32], index: 3, kind: input, shape index: {}]
  %s4 = inlined_call_operand.hbm [shape: f32[32,128], index: 4, kind: input, shape index: {}]
  %s5 = inlined_call_operand.hbm [shape: f32[2,8,32], index: 5, kind: output, shape index: {}]
  %s6 = sld [smem:[#allocation0]]
  $region73: #{tpu_custom_call.1} parent=0
    _
  %s8 = ssub.s32 1, %s6
  %s9 = scalar_select 0, %s8, %s6
  $region1: #{tpu_custom_call.1} parent=0
    #allocation2 [shape = 'u8[8192]{0}', space=vmem, size = 0x2000, scoped, tag = 'input window, operand 0']
    #allocation3 [shape = 's32[2]{0}', space=sflag, size = 0x8, scoped, tag = 'scoped memory for tpu_custom_call.1']
    #allocation4 [shape = 's32[2]{0}', space=sflag, size = 0x8, scoped, tag = 'scoped memory for tpu_custom_call.1']
    #allocation5 [shape = 'u8[8192]{0}', space=vmem, size = 0x2000, scoped, tag = 'input window, operand 1']
    #allocation6 [shape = 's32[2]{0}', space=sflag, size = 0x8, scoped, tag = 'scoped memory for tpu_custom_call.1']
    #allocation7 [shape = 'u8[8192]{0}', space=vmem, size = 0x2000, scoped, tag = 'input window, operand 2']
    #allocation8 [shape = 'u8[8192]{0}', space=vmem, size = 0x2000, scoped, tag = 'input window, operand 3']
    #allocation9 [shape = 's32[2]{0}', space=sflag, size = 0x8, scoped, tag = 'scoped memory for tpu_custom_call.1']
    #allocation10 [shape = 'u8[16384]{0}', space=vmem, size = 0x4000, scoped, tag = 'input window, operand 4, single buffered']
    #allocation11 [shape = 'u8[8192]{0}', space=vmem, size = 0x2000, scoped, tag = 'output window, operand 0']
    %10 = vsyncpa [#allocation3], 0
    %s11 = scalar_lea.sflag [#allocation3], 1
    %12 = vsyncpa %s11, 0
    %13 = vsyncpa [#allocation6], 0
    %s14 = scalar_lea.sflag [#allocation6], 1
    %15 = vsyncpa %s14, 0
    %16 = vsyncpa [#allocation9], 0
    %s17 = scalar_lea.sflag [#allocation9], 1
    %18 = vsyncpa %s17, 0
    %19 = vsyncpa [#allocation4], 0
    %s20 = scalar_lea.sflag [#allocation4], 1
    %21 = vsyncpa %s20, 0
    loop: start=0, step=1, limit=4
    $region2: #{tpu_custom_call.1} parent=1 // loop_pre_header
      _
    $region3: #{tpu_custom_call.1} parent=1 // loop_header
      %s23 = sphi 0, %s27
      %p24 = scmp.ge.s32.totalorder %s23, 4
      %s30 = sphi 0, %s42
      %s31 = sphi 0, %s38
      %s32 = sphi 0, %s30
      %s33 = sphi 0, %s31
      %s34 = sphi 0, %s32
      %s35 = sphi 0, %s33
      %s47 = sphi 0, %s49
      %s50 = sphi 0, %s47
      %s51 = sphi 0, %s50
      %s67 = sphi 0, %s51
      %s73 = sphi 0, %s75
      %s76 = sphi 0, %s73
      %s77 = sphi 0, %s76
      %s93 = sphi 0, %s77
      %s99 = sphi 0, %s101
      %s102 = sphi 0, %s99
      %s103 = sphi 0, %s102
      %s119 = sphi 0, %s103
      %s125 = sphi 0, %s127
      %s128 = sphi 0, %s125
      %s129 = sphi 0, %s128
      %s145 = sphi 0, %s129
      %s149 = sphi 0, %s149
      %s151 = sphi 0, %s149
      %s152 = sphi 0, %s151
      %s166 = sphi 0, %s152
      %s174 = sphi 0, %s176
      %s177 = sphi 0, %s174
      %s178 = sphi 0, %s177
      %s194 = sphi 0, %s178
    $region4: #{tpu_custom_call.1} parent=1 // loop_header_branch
      %26 = sbr.rel (%p24) target = $region8
    $region5: #{tpu_custom_call.1} parent=1 // loop_body
      %s28 = ssub.s32 %s23, 1
      %s29 = ssub.s32 %s23, 2
      %s36 = sadd.s32 1, %s31
      %p37 = scmp.ge.s32.totalorder %s36, 1
      %s38 = scalar_select %p37, 0, %s36
      %s39 = sadd.s32 1, %s30
      %s40 = scalar_select %p37, %s39, %s30
      %p41 = scmp.ge.s32.totalorder %s40, 2
      %s42 = scalar_select %p41, 0, %s40
      %s43 = ssub.s32 %s30, %s42
      %s44 = ssub.s32 %s31, %s38
      %s45 = sor.u32 %s43, %s44
      %p46 = scmp.eq.s32.totalorder %s45, 0
      %s48 = sadd.s32 %s47, 1
      %s49 = scalar_select %p46, %s47, %s48
      %p52 = pneg %p46
      %p53 = scmp.eq.s32.totalorder %s23, 1
      %p54 = por %p52, %p53
      %p55 = scmp.ne.s32.totalorder %s47, %s50
      %p56 = scmp.eq.s32.totalorder %s23, 0
      %p57 = por %p55, %p56
      %p58 = scmp.ne.s32.totalorder %s47, %s50
      %p59 = scmp.eq.s32.totalorder %s28, 1
      %p60 = por %p58, %p59
      %p61 = scmp.ne.s32.totalorder %s50, %s51
      %p62 = scmp.eq.s32.totalorder %s28, 0
      %p63 = por %p61, %p62
      %p64 = scmp.ne.s32.totalorder %s50, %s51
      %p65 = scmp.eq.s32.totalorder %s29, 1
      %p66 = por %p64, %p65
      %p68 = scmp.ne.s32.totalorder %s51, %s67
      %p69 = scmp.eq.s32.totalorder %s29, 0
      %p70 = por %p68, %p69
      %s71 = ssub.s32 %s30, %s42
      %p72 = scmp.eq.s32.totalorder %s71, 0
      %s74 = sadd.s32 %s73, 1
      %s75 = scalar_select %p72, %s73, %s74
      %p78 = pneg %p72
      %p79 = scmp.eq.s32.totalorder %s23, 1
      %p80 = por %p78, %p79
      %p81 = scmp.ne.s32.totalorder %s73, %s76
      %p82 = scmp.eq.s32.totalorder %s23, 0
      %p83 = por %p81, %p82
      %p84 = scmp.ne.s32.totalorder %s73, %s76
      %p85 = scmp.eq.s32.totalorder %s28, 1
      %p86 = por %p84, %p85
      %p87 = scmp.ne.s32.totalorder %s76, %s77
      %p88 = scmp.eq.s32.totalorder %s28, 0
      %p89 = por %p87, %p88
      %p90 = scmp.ne.s32.totalorder %s76, %s77
      %p91 = scmp.eq.s32.totalorder %s29, 1
      %p92 = por %p90, %p91
      %p94 = scmp.ne.s32.totalorder %s77, %s93
      %p95 = scmp.eq.s32.totalorder %s29, 0
      %p96 = por %p94, %p95
      %s97 = ssub.s32 %s30, %s42
      %p98 = scmp.eq.s32.totalorder %s97, 0
      %s100 = sadd.s32 %s99, 1
      %s101 = scalar_select %p98, %s99, %s100
      %p104 = pneg %p98
      %p105 = scmp.eq.s32.totalorder %s23, 1
      %p106 = por %p104, %p105
      %p107 = scmp.ne.s32.totalorder %s99, %s102
      %p108 = scmp.eq.s32.totalorder %s23, 0
      %p109 = por %p107, %p108
      %p110 = scmp.ne.s32.totalorder %s99, %s102
      %p111 = scmp.eq.s32.totalorder %s28, 1
      %p112 = por %p110, %p111
      %p113 = scmp.ne.s32.totalorder %s102, %s103
      %p114 = scmp.eq.s32.totalorder %s28, 0
      %p115 = por %p113, %p114
      %p116 = scmp.ne.s32.totalorder %s102, %s103
      %p117 = scmp.eq.s32.totalorder %s29, 1
      %p118 = por %p116, %p117
      %p120 = scmp.ne.s32.totalorder %s103, %s119
      %p121 = scmp.eq.s32.totalorder %s29, 0
      %p122 = por %p120, %p121
      %s123 = ssub.s32 %s30, %s42
      %p124 = scmp.eq.s32.totalorder %s123, 0
      %s126 = sadd.s32 %s125, 1
      %s127 = scalar_select %p124, %s125, %s126
      %p130 = pneg %p124
      %p131 = scmp.eq.s32.totalorder %s23, 1
      %p132 = por %p130, %p131
      %p133 = scmp.ne.s32.totalorder %s125, %s128
      %p134 = scmp.eq.s32.totalorder %s23, 0
      %p135 = por %p133, %p134
      %p136 = scmp.ne.s32.totalorder %s125, %s128
      %p137 = scmp.eq.s32.totalorder %s28, 1
      %p138 = por %p136, %p137
      %p139 = scmp.ne.s32.totalorder %s128, %s129
      %p140 = scmp.eq.s32.totalorder %s28, 0
      %p141 = por %p139, %p140
      %p142 = scmp.ne.s32.totalorder %s128, %s129
      %p143 = scmp.eq.s32.totalorder %s29, 1
      %p144 = por %p142, %p143
      %p146 = scmp.ne.s32.totalorder %s129, %s145
      %p147 = scmp.eq.s32.totalorder %s29, 0
      %p148 = por %p146, %p147
      %s150 = sadd.s32 %s149, 1
      %p153 = scmp.eq.s32.totalorder %s23, 1
      %p154 = scmp.ne.s32.totalorder %s149, %s151
      %p155 = scmp.eq.s32.totalorder %s23, 0
      %p156 = por %p154, %p155
      %p157 = scmp.ne.s32.totalorder %s149, %s151
      %p158 = scmp.eq.s32.totalorder %s28, 1
      %p159 = por %p157, %p158
      %p160 = scmp.ne.s32.totalorder %s151, %s152
      %p161 = scmp.eq.s32.totalorder %s28, 0
      %p162 = por %p160, %p161
      %p163 = scmp.ne.s32.totalorder %s151, %s152
      %p164 = scmp.eq.s32.totalorder %s29, 1
      %p165 = por %p163, %p164
      %p167 = scmp.ne.s32.totalorder %s152, %s166
      %p168 = scmp.eq.s32.totalorder %s29, 0
      %p169 = por %p167, %p168
      %s170 = ssub.s32 %s30, %s42
      %s171 = ssub.s32 %s31, %s38
      %s172 = sor.u32 %s170, %s171
      %p173 = scmp.eq.s32.totalorder %s172, 0
      %s175 = sadd.s32 %s174, 1
      %s176 = scalar_select %p173, %s174, %s175
      %p179 = pneg %p173
      %p180 = scmp.eq.s32.totalorder %s23, 1
      %p181 = por %p179, %p180
      %p182 = scmp.ne.s32.totalorder %s174, %s177
      %p183 = scmp.eq.s32.totalorder %s23, 0
      %p184 = por %p182, %p183
      %p185 = scmp.ne.s32.totalorder %s174, %s177
      %p186 = scmp.eq.s32.totalorder %s28, 1
      %p187 = por %p185, %p186
      %p188 = scmp.ne.s32.totalorder %s177, %s178
      %p189 = scmp.eq.s32.totalorder %s28, 0
      %p190 = por %p188, %p189
      %p191 = scmp.ne.s32.totalorder %s177, %s178
      %p192 = scmp.eq.s32.totalorder %s29, 1
      %p193 = por %p191, %p192
      %p195 = scmp.ne.s32.totalorder %s178, %s194
      %p196 = scmp.eq.s32.totalorder %s29, 0
      %p197 = por %p195, %p196
      %p198 = scmp.le.s32.totalorder 1, %s23
      %p199 = scmp.lt.s32.totalorder %s23, 3
      %p200 = pnand %p198, %p199
      %p201 = pneg %p200
      // Predicated region
      $region9: #{tpu_custom_call.1} parent=5 // pred_check
        _
      $region10: #{tpu_custom_call.1} parent=5 // pred_check_branch
        %203 = sbr.rel (%p200) target = $region12
      $region11: #{tpu_custom_call.1} parent=5 // pred_region
        %s204 = ssub.s32 %s23, 1
        // Predicated region
        $region13: #{tpu_custom_call.1} parent=11 // pred_check
          %p205 = pneg %p162
        $region14: #{tpu_custom_call.1} parent=11 // pred_check_branch
          %207 = sbr.rel (%p205) target = $region16
        $region15: #{tpu_custom_call.1} parent=11 // pred_region
          %s209 = ssub.s32 512, 512
          %210 = vsyncadd [#allocation9], %s209
          %s211 = sshll.u32 [#allocation10], 4
          %s212 = int_to_ptr.vmem [resolvable:$true] %s211
          %217 = dma.hbm_to_vmem [thread:$0]  %s4, 512, %s212, [#allocation9], 128, 128, 8
        $region16: #{tpu_custom_call.1} parent=11 // pred_fallthru
          _
      $region12: #{tpu_custom_call.1} parent=5 // pred_fallthru
        _
      %p218 = scmp.lt.s32.totalorder %s23, 2
      // Predicated region
      $region17: #{tpu_custom_call.1} parent=5 // pred_check
        %p219 = pneg %p218
      $region18: #{tpu_custom_call.1} parent=5 // pred_check_branch
        %221 = sbr.rel (%p219) target = $region20
      $region19: #{tpu_custom_call.1} parent=5 // pred_region
        // Predicated region
        $region21: #{tpu_custom_call.1} parent=19 // pred_check
          %p222 = pneg %p57
        $region22: #{tpu_custom_call.1} parent=19 // pred_check_branch
          %224 = sbr.rel (%p222) target = $region24
        $region23: #{tpu_custom_call.1} parent=19 // pred_region
          %s225 = sand.u32 %s47, 1
          %s226 = scalar_lea.sflag [#allocation3], %s225
          %s227 = sand.u32 %s47, 1
          %s228 = smul.addr %s227, 8
          %s229 = scalar_lea.vmem [#allocation2], %s228
          %s231 = ssub.s32 128, 128
          %232 = vsyncadd %s226, %s231
          %s233 = sadd.s32 %s31, %s30
          %s234 = smul.addr %s233, 128
          %s235 = scalar_lea.hbm %s0, %s234
          %s237 = sshll.u32 %s229, 4
          %s238 = int_to_ptr.vmem [resolvable:$true] %s237
          %240 = dma.hbm_to_vmem [thread:$0]  %s235, 128, %s238, %s226
        $region24: #{tpu_custom_call.1} parent=19 // pred_fallthru
          _
        // Predicated region
        $region25: #{tpu_custom_call.1} parent=19 // pred_check
          %p241 = pneg %p83
        $region26: #{tpu_custom_call.1} parent=19 // pred_check_branch
          %243 = sbr.rel (%p241) target = $region28
        $region27: #{tpu_custom_call.1} parent=19 // pred_region
          %s244 = sand.u32 %s23, 1
          %s245 = scalar_lea.sflag [#allocation6], %s244
          %s246 = sand.u32 %s73, 1
          %s247 = smul.addr %s246, 8
          %s248 = scalar_lea.vmem [#allocation5], %s247
          %s250 = ssub.s32 128, 128
          %251 = vsyncadd %s245, %s250
          %s252 = smul.addr %s30, 128
          %s253 = scalar_lea.hbm %s1, %s252
          %s255 = sshll.u32 %s248, 4
          %s256 = int_to_ptr.vmem [resolvable:$true] %s255
          %258 = dma.hbm_to_vmem [thread:$0]  %s253, 128, %s256, %s245
        $region28: #{tpu_custom_call.1} parent=19 // pred_fallthru
          _
        // Predicated region
        $region29: #{tpu_custom_call.1} parent=19 // pred_check
          %p259 = pneg %p109
        $region30: #{tpu_custom_call.1} parent=19 // pred_check_branch
          %261 = sbr.rel (%p259) target = $region32
        $region31: #{tpu_custom_call.1} parent=19 // pred_region
          %s262 = sand.u32 %s23, 1
          %s263 = scalar_lea.sflag [#allocation6], %s262
          %s264 = sand.u32 %s99, 1
          %s265 = smul.addr %s264, 8
          %s266 = scalar_lea.vmem [#allocation7], %s265
          %s268 = ssub.s32 128, 128
          %269 = vsyncadd %s263, %s268
          %s270 = smul.addr %s30, 128
          %s271 = scalar_lea.hbm %s2, %s270
          %s273 = sshll.u32 %s266, 4
          %s274 = int_to_ptr.vmem [resolvable:$true] %s273
          %276 = dma.hbm_to_vmem [thread:$0]  %s271, 128, %s274, %s263
        $region32: #{tpu_custom_call.1} parent=19 // pred_fallthru
          _
        // Predicated region
        $region33: #{tpu_custom_call.1} parent=19 // pred_check
          %p277 = pneg %p135
        $region34: #{tpu_custom_call.1} parent=19 // pred_check_branch
          %279 = sbr.rel (%p277) target = $region36
        $region35: #{tpu_custom_call.1} parent=19 // pred_region
          %s280 = sand.u32 %s23, 1
          %s281 = scalar_lea.sflag [#allocation9], %s280
          %s282 = sand.u32 %s125, 1
          %s283 = smul.addr %s282, 8
          %s284 = scalar_lea.vmem [#allocation8], %s283
          %s286 = ssub.s32 128, 128
          %287 = vsyncadd %s281, %s286
          %s288 = smul.addr %s30, 128
          %s289 = scalar_lea.hbm %s3, %s288
          %s291 = sshll.u32 %s284, 4
          %s292 = int_to_ptr.vmem [resolvable:$true] %s291
          %294 = dma.hbm_to_vmem [thread:$0]  %s289, 128, %s292, %s281
        $region36: #{tpu_custom_call.1} parent=19 // pred_fallthru
          _
      $region20: #{tpu_custom_call.1} parent=5 // pred_fallthru
        _
      %p295 = scmp.le.s32.totalorder 1, %s23
      %p296 = scmp.lt.s32.totalorder %s23, 3
      %p297 = pnand %p295, %p296
      %p298 = pneg %p297
      // Predicated region
      $region37: #{tpu_custom_call.1} parent=5 // pred_check
        _
      $region38: #{tpu_custom_call.1} parent=5 // pred_check_branch
        %300 = sbr.rel (%p297) target = $region40
      $region39: #{tpu_custom_call.1} parent=5 // pred_region
        %s301 = ssub.s32 %s23, 1
        %s302 = sand.u32 %s50, 1
        %s303 = scalar_lea.sflag [#allocation3], %s302
        %s304 = sand.u32 %s50, 1
        %s305 = smul.addr %s304, 8
        %s306 = scalar_lea.vmem [#allocation2], %s305
        // Predicated region
        $region41: #{tpu_custom_call.1} parent=39 // pred_check
          %p307 = pneg %p63
        $region42: #{tpu_custom_call.1} parent=39 // pred_check_branch
          %309 = sbr.rel (%p307) target = $region44
        $region43: #{tpu_custom_call.1} parent=39 // pred_region
          %310 = dma.done %s303, 128
        $region44: #{tpu_custom_call.1} parent=39 // pred_fallthru
          _
        %s311 = sand.u32 %s28, 1
        %s312 = scalar_lea.sflag [#allocation6], %s311
        %s313 = sand.u32 %s76, 1
        %s314 = smul.addr %s313, 8
        %s315 = scalar_lea.vmem [#allocation5], %s314
        // Predicated region
        $region45: #{tpu_custom_call.1} parent=39 // pred_check
          %p316 = pneg %p89
        $region46: #{tpu_custom_call.1} parent=39 // pred_check_branch
          %318 = sbr.rel (%p316) target = $region48
        $region47: #{tpu_custom_call.1} parent=39 // pred_region
          %319 = dma.done %s312, 128
        $region48: #{tpu_custom_call.1} parent=39 // pred_fallthru
          _
        %s320 = sand.u32 %s28, 1
        %s321 = scalar_lea.sflag [#allocation6], %s320
        %s322 = sand.u32 %s102, 1
        %s323 = smul.addr %s322, 8
        %s324 = scalar_lea.vmem [#allocation7], %s323
        // Predicated region
        $region49: #{tpu_custom_call.1} parent=39 // pred_check
          %p325 = pneg %p115
        $region50: #{tpu_custom_call.1} parent=39 // pred_check_branch
          %327 = sbr.rel (%p325) target = $region52
        $region51: #{tpu_custom_call.1} parent=39 // pred_region
          %328 = dma.done %s321, 128
        $region52: #{tpu_custom_call.1} parent=39 // pred_fallthru
          _
        %s329 = sand.u32 %s28, 1
        %s330 = scalar_lea.sflag [#allocation9], %s329
        %s331 = sand.u32 %s128, 1
        %s332 = smul.addr %s331, 8
        %s333 = scalar_lea.vmem [#allocation8], %s332
        // Predicated region
        $region53: #{tpu_custom_call.1} parent=39 // pred_check
          %p334 = pneg %p141
        $region54: #{tpu_custom_call.1} parent=39 // pred_check_branch
          %336 = sbr.rel (%p334) target = $region56
        $region55: #{tpu_custom_call.1} parent=39 // pred_region
          %337 = dma.done %s330, 128
        $region56: #{tpu_custom_call.1} parent=39 // pred_fallthru
          _
        // Predicated region
        $region57: #{tpu_custom_call.1} parent=39 // pred_check
          %p338 = pneg %p162
        $region58: #{tpu_custom_call.1} parent=39 // pred_check_branch
          %340 = sbr.rel (%p338) target = $region60
        $region59: #{tpu_custom_call.1} parent=39 // pred_region
          %341 = dma.done [#allocation9], 512
        $region60: #{tpu_custom_call.1} parent=39 // pred_fallthru
          _
        %s342 = sand.u32 %s50, 1
        %s343 = scalar_lea.sflag [#allocation3], %s342
        %s344 = sand.u32 %s50, 1
        %s345 = smul.addr %s344, 8
        %s346 = scalar_lea.vmem [#allocation2], %s345
        %p347 = pneg %p63
        %p348 = pneg %p60
        %s349 = sand.u32 %s28, 1
        %s350 = scalar_lea.sflag [#allocation6], %s349
        %s351 = sand.u32 %s76, 1
        %s352 = smul.addr %s351, 8
        %s353 = scalar_lea.vmem [#allocation5], %s352
        %p354 = pneg %p89
        %p355 = pneg %p86
        %s356 = sand.u32 %s28, 1
        %s357 = scalar_lea.sflag [#allocation6], %s356
        %s358 = sand.u32 %s102, 1
        %s359 = smul.addr %s358, 8
        %s360 = scalar_lea.vmem [#allocation7], %s359
        %p361 = pneg %p115
        %p362 = pneg %p112
        %s363 = sand.u32 %s28, 1
        %s364 = scalar_lea.sflag [#allocation9], %s363
        %s365 = sand.u32 %s128, 1
        %s366 = smul.addr %s365, 8
        %s367 = scalar_lea.vmem [#allocation8], %s366
        %p368 = pneg %p141
        %p369 = pneg %p138
        %p370 = pneg %p162
        %p371 = pneg %p159
        %p372 = pneg %p190
        %p373 = pneg %p187
        %s374 = sand.u32 %s177, 1
        %s375 = scalar_lea.sflag [#allocation4], %s374
        %s376 = sand.u32 %s177, 1
        %s377 = smul.addr %s376, 8
        %s378 = scalar_lea.vmem [#allocation11], %s377
        %v379 = vld [vmem:[%s306] sm:$0xff]
        %v380 = vmul.f32 %v379, 0.17677669
        %v381 = vld [vmem:[%s315] sm:$0xff]
        %v382 = vld [vmem:[%s324] sm:$0xff]
        %v383 = vld [vmem:[%s333] sm:$0xff]
        %v384 = vld [vmem:[#allocation10] sm:$0xff]
        %v385 = vld [vmem:[#allocation10 + $0x8] sm:$0xff]
        %v386 = vld [vmem:[#allocation10 + $0x10] sm:$0xff]
        %v387 = vld [vmem:[#allocation10 + $0x18] sm:$0xff]
        %s388 = smul.u32 %s33, 8
        %v389 = vlaneseq
        %v390 = vshrl.u32 %v389, 7
        %v391 = vstv %s388
        %v392 = vadd.s32 %v391, %v390
        %v393 = vlaneseq
        %v394 = vand.u32 %v393, 127
        %vm395 = vcmp.le.s32.totalorder %v394, %v392
        %vm396 = vcmask 261120
        %v398 = vsel %vm396, %v380, 0
        %v401 = vsel %vm396, %v382, 0
        %403 = vmatprep.subr.mxu0 0.0
        %404 = vmatpush1.xpose.msra.mxu0 %v401
        %405 = vmatprep.subr.mxu0 0.0
        %406 = vmatpush1.xpose.msra.mxu0 0.0
        %407 = vmatprep.subr.mxu0 0.0
        %408 = vmatpush1.xpose.msra.mxu0 0.0
        %409 = vmatprep.subr.mxu0 0.0
        %410 = vmatpush1.xpose.msra.mxu0 0.0
        %411 = vmatprep.subr.mxu0 0.0
        %412 = vmatpush1.xpose.msra.mxu0 0.0
        %413 = vmatprep.subr.mxu0 0.0
        %414 = vmatpush1.xpose.msra.mxu0 0.0
        %415 = vmatprep.subr.mxu0 0.0
        %416 = vmatpush1.xpose.msra.mxu0 0.0
        %417 = vmatprep.subr.mxu0 0.0
        %418 = vmatpush1.xpose.msra.mxu0 0.0
        %419 = vmatprep.subr.mxu0 0.0
        %420 = vmatpush1.xpose.msra.mxu0 0.0
        %421 = vmatprep.subr.mxu0 0.0
        %422 = vmatpush1.xpose.msra.mxu0 0.0
        %423 = vmatprep.subr.mxu0 0.0
        %424 = vmatpush1.xpose.msra.mxu0 0.0
        %425 = vmatprep.subr.mxu0 0.0
        %426 = vmatpush1.xpose.msra.mxu0 0.0
        %427 = vmatprep.subr.mxu0 0.0
        %428 = vmatpush1.xpose.msra.mxu0 0.0
        %429 = vmatprep.subr.mxu0 0.0
        %430 = vmatpush1.xpose.msra.mxu0 0.0
        %431 = vmatprep.subr.mxu0 0.0
        %432 = vmatpush1.xpose.msra.mxu0 0.0
        %433 = vmatprep.subr.mxu0 0.0
        %434 = vmatpush1.xpose.msra.mxu0 0.0
        %435 = vmatprep.subr.mxu0 0.0
        %436 = vmatpush1.xpose.msra.mxu0 0.0
        %437 = vmatprep.subr.mxu0 0.0
        %438 = vmatpush1.xpose.msra.mxu0 0.0
        %439 = vmatprep.subr.mxu0 0.0
        %440 = vmatpush1.xpose.msra.mxu0 0.0
        %441 = vmatprep.subr.mxu0 0.0
        %442 = vmatpush1.xpose.msra.mxu0 0.0
        %443 = vmatprep.subr.mxu0 0.0
        %444 = vmatpush1.xpose.msra.mxu0 0.0
        %445 = vmatprep.subr.mxu0 0.0
        %446 = vmatpush1.xpose.msra.mxu0 0.0
        %447 = vmatprep.subr.mxu0 0.0
        %448 = vmatpush1.xpose.msra.mxu0 0.0
        %449 = vmatprep.subr.mxu0 0.0
        %450 = vmatpush1.xpose.msra.mxu0 0.0
        %451 = vmatprep.subr.mxu0 0.0
        %452 = vmatpush1.xpose.msra.mxu0 0.0
        %453 = vmatprep.subr.mxu0 0.0
        %454 = vmatpush1.xpose.msra.mxu0 0.0
        %455 = vmatprep.subr.mxu0 0.0
        %456 = vmatpush1.xpose.msra.mxu0 0.0
        %457 = vmatprep.subr.mxu0 0.0
        %458 = vmatpush1.xpose.msra.mxu0 0.0
        %459 = vmatprep.subr.mxu0 0.0
        %460 = vmatpush1.xpose.msra.mxu0 0.0
        %461 = vmatprep.subr.mxu0 0.0
        %462 = vmatpush1.xpose.msra.mxu0 0.0
        %463 = vmatprep.subr.mxu0 0.0
        %464 = vmatpush1.xpose.msra.mxu0 0.0
        %465 = vmatprep.subr.mxu0 0.0
        %466 = vmatpush1.xpose.msra.mxu0 0.0
        %467 = vmatprep.mubr.f32.mxu0 0.0
        %468 = vmatmul.mubr.f32.gmra.mrb[0].mxu0 %v398
        %v469 = vpop.f32.mrb[0].mxu0
        %v470 = vadd.f32 0.0, %v469
        %v471 = vpop.f32.mrb[0].mxu0
        %472 = vdwg.mxu0
        %v473 = vxor.u32 %v470, 2147483648
        %v474 = vmul.f32 %v473, 1.442695
        %v475 = vpow.pop %v474
        %v476 = vadd.f32 %v475, 1.0
        %v477 = vrcp.pop %v476
        %v478 = vmul.f32 1.0, %v477
        %v479 = vsel %vm395, %v478, 0.0
        %481 = vrot.lane.b32.xlu0 %v479, 127
        %v482 = vpop.permute.xlu0 %481
        %vm484 = vcmask 56320
        %v485 = vsel %vm484, %v482, 0.0
        %v486 = vadd.f32 %v479, %v485
        %488 = vrot.lane.b32.xlu0 %v486, 126
        %v489 = vpop.permute.xlu0 %488
        %vm491 = vcmask 48128
        %v492 = vsel %vm491, %v489, 0.0
        %v493 = vadd.f32 %v486, %v492
        %495 = vrot.lane.b32.xlu0 %v493, 124
        %v496 = vpop.permute.xlu0 %495
        %vm498 = vcmask 31744
        %v499 = vsel %vm498, %v496, 0.0
        %v500 = vadd.f32 %v493, %v499
        %501 = vmatprep.subr.mxu0 0.0
        %502 = vmatpush1.msra.mxu0 %v384
        %503 = vmatprep.subr.mxu0 0.0
        %504 = vmatpush1.msra.mxu0 %v385
        %505 = vmatprep.subr.mxu0 0.0
        %506 = vmatpush1.msra.mxu0 %v386
        %507 = vmatprep.subr.mxu0 0.0
        %508 = vmatpush1.msra.mxu0 %v387
        %509 = vmatprep.subr.mxu0 0.0
        %510 = vmatpush1.msra.mxu0 0.0
        %511 = vmatprep.subr.mxu0 0.0
        %512 = vmatpush1.msra.mxu0 0.0
        %513 = vmatprep.subr.mxu0 0.0
        %514 = vmatpush1.msra.mxu0 0.0
        %515 = vmatprep.subr.mxu0 0.0
        %516 = vmatpush1.msra.mxu0 0.0
        %517 = vmatprep.subr.mxu0 0.0
        %518 = vmatpush1.msra.mxu0 0.0
        %519 = vmatprep.subr.mxu0 0.0
        %520 = vmatpush1.msra.mxu0 0.0
        %521 = vmatprep.subr.mxu0 0.0
        %522 = vmatpush1.msra.mxu0 0.0
        %523 = vmatprep.subr.mxu0 0.0
        %524 = vmatpush1.msra.mxu0 0.0
        %525 = vmatprep.subr.mxu0 0.0
        %526 = vmatpush1.msra.mxu0 0.0
        %527 = vmatprep.subr.mxu0 0.0
        %528 = vmatpush1.msra.mxu0 0.0
        %529 = vmatprep.subr.mxu0 0.0
        %530 = vmatpush1.msra.mxu0 0.0
        %531 = vmatprep.subr.mxu0 0.0
        %532 = vmatpush1.msra.mxu0 0.0
        %533 = vmatprep.subr.mxu0 0.0
        %534 = vmatpush1.msra.mxu0 0.0
        %535 = vmatprep.subr.mxu0 0.0
        %536 = vmatpush1.msra.mxu0 0.0
        %537 = vmatprep.subr.mxu0 0.0
        %538 = vmatpush1.msra.mxu0 0.0
        %539 = vmatprep.subr.mxu0 0.0
        %540 = vmatpush1.msra.mxu0 0.0
        %541 = vmatprep.subr.mxu0 0.0
        %542 = vmatpush1.msra.mxu0 0.0
        %543 = vmatprep.subr.mxu0 0.0
        %544 = vmatpush1.msra.mxu0 0.0
        %545 = vmatprep.subr.mxu0 0.0
        %546 = vmatpush1.msra.mxu0 0.0
        %547 = vmatprep.subr.mxu0 0.0
        %548 = vmatpush1.msra.mxu0 0.0
        %549 = vmatprep.subr.mxu0 0.0
        %550 = vmatpush1.msra.mxu0 0.0
        %551 = vmatprep.subr.mxu0 0.0
        %552 = vmatpush1.msra.mxu0 0.0
        %553 = vmatprep.subr.mxu0 0.0
        %554 = vmatpush1.msra.mxu0 0.0
        %555 = vmatprep.subr.mxu0 0.0
        %556 = vmatpush1.msra.mxu0 0.0
        %557 = vmatprep.subr.mxu0 0.0
        %558 = vmatpush1.msra.mxu0 0.0
        %559 = vmatprep.subr.mxu0 0.0
        %560 = vmatpush1.msra.mxu0 0.0
        %561 = vmatprep.subr.mxu0 0.0
        %562 = vmatpush1.msra.mxu0 0.0
        %563 = vmatprep.subr.mxu0 0.0
        %564 = vmatpush1.msra.mxu0 0.0
        %565 = vmatprep.mubr.f32.mxu0 0.0
        %566 = vmatmul.mubr.f32.gmra.mrb[0].mxu0 %v398
        %v567 = vpop.f32.mrb[0].mxu0
        %v568 = vadd.f32 0.0, %v567
        %v569 = vpop.f32.mrb[0].mxu0
        %570 = vdwg.mxu0
        %572 = vrot.lane.b32.xlu0 %v568, 1
        %v573 = vpop.permute.xlu0 %572
        %v575 = vsub.f32 %v568, %v573
        %v576 = vmax.f32 %v500, 0.0
        %v577 = vmin.f32 %v576, 1.0
        %579 = vset.pattern.permute.xlu0 1
        %580 = vperm.xlu0 %579, %v575
        %v581 = vpop.permute.xlu0 %580
        %v583 = vmul.f32 %v581, %v577
        %v584 = vadd.f32 %v583, 0.0
        %v585 = vsub.f32 %v500, 1.0
        %v586 = vmax.f32 %v585, 0.0
        %v587 = vmin.f32 %v586, 1.0
        %588 = vset.pattern.permute.xlu0 2
        %589 = vperm.xlu0 %588, %v575
        %v590 = vpop.permute.xlu0 %589
        %v592 = vmul.f32 %v590, %v587
        %v593 = vadd.f32 %v584, %v592
        %v594 = vsub.f32 %v500, 2.0
        %v595 = vmax.f32 %v594, 0.0
        %v596 = vmin.f32 %v595, 1.0
        %597 = vset.pattern.permute.xlu0 3
        %598 = vperm.xlu0 %597, %v575
        %v599 = vpop.permute.xlu0 %598
        %v601 = vmul.f32 %v599, %v596
        %v602 = vadd.f32 %v593, %v601
        %v603 = vsub.f32 %v500, 3.0
        %v604 = vmax.f32 %v603, 0.0
        %v605 = vmin.f32 %v604, 1.0
        %606 = vset.pattern.permute.xlu0 4
        %607 = vperm.xlu0 %606, %v575
        %v608 = vpop.permute.xlu0 %607
        %v610 = vmul.f32 %v608, %v605
        %v611 = vadd.f32 %v602, %v610
        %v612 = vsub.f32 %v500, 4.0
        %v613 = vmax.f32 %v612, 0.0
        %v614 = vmin.f32 %v613, 1.0
        %615 = vset.pattern.permute.xlu0 5
        %616 = vperm.xlu0 %615, %v575
        %v617 = vpop.permute.xlu0 %616
        %v619 = vmul.f32 %v617, %v614
        %v620 = vadd.f32 %v611, %v619
        %v621 = vsub.f32 %v500, 5.0
        %v622 = vmax.f32 %v621, 0.0
        %v623 = vmin.f32 %v622, 1.0
        %624 = vset.pattern.permute.xlu0 6
        %625 = vperm.xlu0 %624, %v575
        %v626 = vpop.permute.xlu0 %625
        %v628 = vmul.f32 %v626, %v623
        %v629 = vadd.f32 %v620, %v628
        %v630 = vsub.f32 %v500, 6.0
        %v631 = vmax.f32 %v630, 0.0
        %v632 = vmin.f32 %v631, 1.0
        %633 = vset.pattern.permute.xlu0 7
        %634 = vperm.xlu0 %633, %v575
        %v635 = vpop.permute.xlu0 %634
        %v637 = vmul.f32 %v635, %v632
        %v638 = vadd.f32 %v629, %v637
        %v639 = vsub.f32 %v500, 7.0
        %v640 = vmax.f32 %v639, 0.0
        %v641 = vmin.f32 %v640, 1.0
        %642 = vset.pattern.permute.xlu0 8
        %643 = vperm.xlu0 %642, %v575
        %v644 = vpop.permute.xlu0 %643
        %v646 = vmul.f32 %v644, %v641
        %v647 = vadd.f32 %v638, %v646
        %648 = vset.pattern.permute.xlu0 0
        %649 = vperm.xlu0 %648, %v568
        %v650 = vpop.permute.xlu0 %649
        %v652 = vadd.f32 %v647, %v650
        %v654 = vsel %vm396, %v381, 0
        %656 = vmatprep.subr.mxu0 0.0
        %657 = vmatpush1.xpose.msra.mxu0 %v654
        %658 = vmatprep.subr.mxu0 0.0
        %659 = vmatpush1.xpose.msra.mxu0 0.0
        %660 = vmatprep.subr.mxu0 0.0
        %661 = vmatpush1.xpose.msra.mxu0 0.0
        %662 = vmatprep.subr.mxu0 0.0
        %663 = vmatpush1.xpose.msra.mxu0 0.0
        %664 = vmatprep.subr.mxu0 0.0
        %665 = vmatpush1.xpose.msra.mxu0 0.0
        %666 = vmatprep.subr.mxu0 0.0
        %667 = vmatpush1.xpose.msra.mxu0 0.0
        %668 = vmatprep.subr.mxu0 0.0
        %669 = vmatpush1.xpose.msra.mxu0 0.0
        %670 = vmatprep.subr.mxu0 0.0
        %671 = vmatpush1.xpose.msra.mxu0 0.0
        %672 = vmatprep.subr.mxu0 0.0
        %673 = vmatpush1.xpose.msra.mxu0 0.0
        %674 = vmatprep.subr.mxu0 0.0
        %675 = vmatpush1.xpose.msra.mxu0 0.0
        %676 = vmatprep.subr.mxu0 0.0
        %677 = vmatpush1.xpose.msra.mxu0 0.0
        %678 = vmatprep.subr.mxu0 0.0
        %679 = vmatpush1.xpose.msra.mxu0 0.0
        %680 = vmatprep.subr.mxu0 0.0
        %681 = vmatpush1.xpose.msra.mxu0 0.0
        %682 = vmatprep.subr.mxu0 0.0
        %683 = vmatpush1.xpose.msra.mxu0 0.0
        %684 = vmatprep.subr.mxu0 0.0
        %685 = vmatpush1.xpose.msra.mxu0 0.0
        %686 = vmatprep.subr.mxu0 0.0
        %687 = vmatpush1.xpose.msra.mxu0 0.0
        %688 = vmatprep.subr.mxu0 0.0
        %689 = vmatpush1.xpose.msra.mxu0 0.0
        %690 = vmatprep.subr.mxu0 0.0
        %691 = vmatpush1.xpose.msra.mxu0 0.0
        %692 = vmatprep.subr.mxu0 0.0
        %693 = vmatpush1.xpose.msra.mxu0 0.0
        %694 = vmatprep.subr.mxu0 0.0
        %695 = vmatpush1.xpose.msra.mxu0 0.0
        %696 = vmatprep.subr.mxu0 0.0
        %697 = vmatpush1.xpose.msra.mxu0 0.0
        %698 = vmatprep.subr.mxu0 0.0
        %699 = vmatpush1.xpose.msra.mxu0 0.0
        %700 = vmatprep.subr.mxu0 0.0
        %701 = vmatpush1.xpose.msra.mxu0 0.0
        %702 = vmatprep.subr.mxu0 0.0
        %703 = vmatpush1.xpose.msra.mxu0 0.0
        %704 = vmatprep.subr.mxu0 0.0
        %705 = vmatpush1.xpose.msra.mxu0 0.0
        %706 = vmatprep.subr.mxu0 0.0
        %707 = vmatpush1.xpose.msra.mxu0 0.0
        %708 = vmatprep.subr.mxu0 0.0
        %709 = vmatpush1.xpose.msra.mxu0 0.0
        %710 = vmatprep.subr.mxu0 0.0
        %711 = vmatpush1.xpose.msra.mxu0 0.0
        %712 = vmatprep.subr.mxu0 0.0
        %713 = vmatpush1.xpose.msra.mxu0 0.0
        %714 = vmatprep.subr.mxu0 0.0
        %715 = vmatpush1.xpose.msra.mxu0 0.0
        %716 = vmatprep.subr.mxu0 0.0
        %717 = vmatpush1.xpose.msra.mxu0 0.0
        %718 = vmatprep.subr.mxu0 0.0
        %719 = vmatpush1.xpose.msra.mxu0 0.0
        %720 = vmatprep.mubr.f32.mxu0 0.0
        %721 = vmatmul.mubr.f32.gmra.mrb[0].mxu0 %v398
        %v722 = vpop.f32.mrb[0].mxu0
        %v723 = vadd.f32 %v652, %v722
        %v724 = vpop.f32.mrb[0].mxu0
        %725 = vdwg.mxu0
        %v726 = vsel %vm395, %v723, -1e+30
        %vm727 = vcmask 64512
        %v728 = vsel %vm727, %v726, -inf
        %729 = vmax.xlane.f32.xlu0 %v728
        %v730 = vpop.xlane.xlu0 %729
        %v731 = vsub.f32 %v726, %v730
        %v732 = vmul.f32 %v731, 1.442695
        %v733 = vpow.pop %v732
        %v734 = vsel %vm727, %v733, 0.0
        %735 = vadd.xlane.f32.xlu0 %v734
        %v736 = vpop.xlane.xlu0 %735
        %v737 = vrcp.pop %v736
        %v738 = vmul.f32 %v733, %v737
        %v740 = vsel %vm727, %v738, 0
        %742 = vmatprep.subr.mxu0 0.0
        %743 = vmatpush1.msra.mxu0 %v383
        %744 = vmatprep.subr.mxu0 0.0
        %745 = vmatpush1.msra.mxu0 0.0
        %746 = vmatprep.subr.mxu0 0.0
        %747 = vmatpush1.msra.mxu0 0.0
        %748 = vmatprep.subr.mxu0 0.0
        %749 = vmatpush1.msra.mxu0 0.0
        %750 = vmatprep.subr.mxu0 0.0
        %751 = vmatpush1.msra.mxu0 0.0
        %752 = vmatprep.subr.mxu0 0.0
        %753 = vmatpush1.msra.mxu0 0.0
        %754 = vmatprep.subr.mxu0 0.0
        %755 = vmatpush1.msra.mxu0 0.0
        %756 = vmatprep.subr.mxu0 0.0
        %757 = vmatpush1.msra.mxu0 0.0
        %758 = vmatprep.subr.mxu0 0.0
        %759 = vmatpush1.msra.mxu0 0.0
        %760 = vmatprep.subr.mxu0 0.0
        %761 = vmatpush1.msra.mxu0 0.0
        %762 = vmatprep.subr.mxu0 0.0
        %763 = vmatpush1.msra.mxu0 0.0
        %764 = vmatprep.subr.mxu0 0.0
        %765 = vmatpush1.msra.mxu0 0.0
        %766 = vmatprep.subr.mxu0 0.0
        %767 = vmatpush1.msra.mxu0 0.0
        %768 = vmatprep.subr.mxu0 0.0
        %769 = vmatpush1.msra.mxu0 0.0
        %770 = vmatprep.subr.mxu0 0.0
        %771 = vmatpush1.msra.mxu0 0.0
        %772 = vmatprep.subr.mxu0 0.0
        %773 = vmatpush1.msra.mxu0 0.0
        %774 = vmatprep.subr.mxu0 0.0
        %775 = vmatpush1.msra.mxu0 0.0
        %776 = vmatprep.subr.mxu0 0.0
        %777 = vmatpush1.msra.mxu0 0.0
        %778 = vmatprep.subr.mxu0 0.0
        %779 = vmatpush1.msra.mxu0 0.0
        %780 = vmatprep.subr.mxu0 0.0
        %781 = vmatpush1.msra.mxu0 0.0
        %782 = vmatprep.subr.mxu0 0.0
        %783 = vmatpush1.msra.mxu0 0.0
        %784 = vmatprep.subr.mxu0 0.0
        %785 = vmatpush1.msra.mxu0 0.0
        %786 = vmatprep.subr.mxu0 0.0
        %787 = vmatpush1.msra.mxu0 0.0
        %788 = vmatprep.subr.mxu0 0.0
        %789 = vmatpush1.msra.mxu0 0.0
        %790 = vmatprep.subr.mxu0 0.0
        %791 = vmatpush1.msra.mxu0 0.0
        %792 = vmatprep.subr.mxu0 0.0
        %793 = vmatpush1.msra.mxu0 0.0
        %794 = vmatprep.subr.mxu0 0.0
        %795 = vmatpush1.msra.mxu0 0.0
        %796 = vmatprep.subr.mxu0 0.0
        %797 = vmatpush1.msra.mxu0 0.0
        %798 = vmatprep.subr.mxu0 0.0
        %799 = vmatpush1.msra.mxu0 0.0
        %800 = vmatprep.subr.mxu0 0.0
        %801 = vmatpush1.msra.mxu0 0.0
        %802 = vmatprep.subr.mxu0 0.0
        %803 = vmatpush1.msra.mxu0 0.0
        %804 = vmatprep.subr.mxu0 0.0
        %805 = vmatpush1.msra.mxu0 0.0
        %806 = vmatprep.mubr.f32.mxu0 0.0
        %807 = vmatmul.mubr.f32.gmra.mrb[0].mxu0 %v740
        %v808 = vpop.f32.mrb[0].mxu0
        %v809 = vadd.f32 0.0, %v808
        %v810 = vpop.f32.mrb[0].mxu0
        %811 = vdwg.mxu0
        %812 = vst.msk [vmem:[%s378] sm:$0xff] %vm396, %v809
        %s813 = sand.u32 %s177, 1
        %s814 = scalar_lea.sflag [#allocation4], %s813
        %s815 = sand.u32 %s177, 1
        %s816 = smul.addr %s815, 8
        %s817 = scalar_lea.vmem [#allocation11], %s816
        // Predicated region
        $region61: #{tpu_custom_call.1} parent=39 // pred_check
          %p818 = pneg %p187
        $region62: #{tpu_custom_call.1} parent=39 // pred_check_branch
          %820 = sbr.rel (%p818) target = $region64
        $region63: #{tpu_custom_call.1} parent=39 // pred_region
          %s822 = ssub.s32 128, 128
          %823 = vsyncadd %s814, %s822
          %s824 = sadd.s32 %s33, %s32
          %s825 = smul.addr %s824, 128
          %s826 = scalar_lea.hbm %s5, %s825
          %s828 = sshll.u32 %s817, 4
          %s829 = int_to_ptr.vmem [resolvable:$true] %s828
          %831 = dma.vmem_to_hbm [thread:$0]  %s829, 128, %s826, %s814
        $region64: #{tpu_custom_call.1} parent=39 // pred_fallthru
          _
      $region40: #{tpu_custom_call.1} parent=5 // pred_fallthru
        _
      %p832 = scmp.le.s32.totalorder 2, %s23
      // Predicated region
      $region65: #{tpu_custom_call.1} parent=5 // pred_check
        %p833 = pneg %p832
      $region66: #{tpu_custom_call.1} parent=5 // pred_check_branch
        %835 = sbr.rel (%p833) target = $region68
      $region67: #{tpu_custom_call.1} parent=5 // pred_region
        %s836 = ssub.s32 %s23, 2
        // Predicated region
        $region69: #{tpu_custom_call.1} parent=67 // pred_check
          %p837 = pneg %p193
        $region70: #{tpu_custom_call.1} parent=67 // pred_check_branch
          %839 = sbr.rel (%p837) target = $region72
        $region71: #{tpu_custom_call.1} parent=67 // pred_region
          %s840 = sand.u32 %s178, 1
          %s841 = scalar_lea.sflag [#allocation4], %s840
          %s842 = sand.u32 %s178, 1
          %s843 = smul.addr %s842, 8
          %s844 = scalar_lea.vmem [#allocation11], %s843
          %845 = dma.done %s841, 128
        $region72: #{tpu_custom_call.1} parent=67 // pred_fallthru
          _
      $region68: #{tpu_custom_call.1} parent=5 // pred_fallthru
        _
    $region6: #{tpu_custom_call.1} parent=1 // loop_footer
      %s27 = sadd.s32 1, %s23
    $region7: #{tpu_custom_call.1} parent=1 // loop_footer_branch
      %22 = sbr.rel target = $region3
    $region8: #{tpu_custom_call.1} parent=1 // loop_exit
      _
    %846 = vsyncpa [#allocation3], 1
    %s847 = scalar_lea.sflag [#allocation3], 1
    %848 = vsyncpa %s847, 1
    %849 = vsyncpa [#allocation6], 1
    %s850 = scalar_lea.sflag [#allocation6], 1
    %851 = vsyncpa %s850, 1
    %852 = vsyncpa [#allocation9], 1
    %s853 = scalar_lea.sflag [#allocation9], 1
    %854 = vsyncpa %s853, 1
    %855 = vsyncpa [#allocation4], 1
    %s856 = scalar_lea.sflag [#allocation4], 1
    %857 = vsyncpa %s856, 1

</llo_original>
